<compile_context>
chip_gen: v7x
topology: tpu7x:2x2x1
jax: 0.10.0
libtpu: 0.0.40
codegen_flags: <defaults>
</compile_context>

<pallas_src>
import jax
import jax.numpy as jnp
from jax.experimental import pallas as pl
from jax.experimental.pallas import tpu as pltpu


def _round_up(x, m):
    return ((x + m - 1) // m) * m


# ---------------------------------------------------------------- kernels ---
def _conv_stats_kernel(g_ref, w_ref, y_ref, psum_ref, psq_ref):
    """One N-tile: single lane-dense matmul + per-tile BN partial statistics.

    g_ref   : (TN, KC)   bf16  gathered + flattened neighbor features
    w_ref   : (KC, CO)   bf16  flattened conv weight (block index fixed -> loaded once)
    y_ref   : (TN, CO)   f32   conv output tile
    psum_ref: (1, 8, CO) f32   per-tile partial sum of y   (sublane-replicated)
    psq_ref : (1, 8, CO) f32   per-tile partial sum of y*y (sublane-replicated)
    """
    y = jnp.dot(g_ref[...], w_ref[...], preferred_element_type=jnp.float32)
    y_ref[...] = y
    s = jnp.sum(y, axis=0, keepdims=True)           # (1, CO)
    sq = jnp.sum(y * y, axis=0, keepdims=True)      # (1, CO)
    psum_ref[...] = jnp.broadcast_to(s[None], psum_ref.shape)
    psq_ref[...] = jnp.broadcast_to(sq[None], psq_ref.shape)


def _bn_relu_kernel(y_ref, scale_ref, bias_ref, o_ref):
    """One N-tile: fused BatchNorm affine + ReLU (scale/bias pre-folded)."""
    o_ref[...] = jnp.maximum(
        y_ref[...] * scale_ref[...] + bias_ref[...], 0.0
    ).astype(o_ref.dtype)


# ----------------------------------------------------------------- wrapper ---
def basic_sparse_deconvolution_block(coords, feats, weight, gamma, beta,
                                     grid_size, ks=3, eps=1e-5,
                                     tile_n_cap=4096):
    """coords [N,4] int32, feats [N,inc] f32, weight [ks^3, inc, outc] f32."""
    n, inc = feats.shape
    k3, _, outc = weight.shape
    b = int(grid_size[0])
    s = int(grid_size[1])

    # ---- JAX glue: kernel map (neighbor indices) ---------------------------
    # TODO(synk): for production grid sizes replace the dense B*S^3 lookup
    # volume with a hash / sorted-coordinate lookup fed via scalar prefetch.
    grid_idx = -jnp.ones((b, s, s, s), jnp.int32)
    grid_idx = grid_idx.at[coords[:, 0], coords[:, 1],
                           coords[:, 2], coords[:, 3]].set(
        jnp.arange(n, dtype=jnp.int32))

    r = jnp.arange(ks, dtype=jnp.int32) - (ks // 2)
    ox, oy, oz = jnp.meshgrid(r, r, r, indexing="ij")
    offsets = jnp.stack([ox.ravel(), oy.ravel(), oz.ravel()], axis=-1)  # [K3,3]

    # transposed conv: input j contributes to output i via offset k iff
    # coord_j == coord_i - offset_k
    nbr = coords[None, :, 1:4] - offsets[:, None, :]                    # [K3,N,3]
    in_bounds = jnp.all((nbr >= 0) & (nbr < s), axis=-1)                # [K3,N]
    nbr_c = jnp.clip(nbr, 0, s - 1)
    bidx = jnp.broadcast_to(coords[None, :, 0], (k3, n))
    idx = grid_idx[bidx, nbr_c[..., 0], nbr_c[..., 1], nbr_c[..., 2]]
    valid = in_bounds & (idx >= 0)                                      # [K3,N]

    # lane-dense LHS [N, K3*inc] and flattened weight [K3*inc, outc]
    # TODO(synk): the gather still duplicates feats K3x in HBM; an in-kernel
    # gather (scalar-prefetched idx + VMEM-resident feats) would remove it.
    gathered = jnp.where(valid[..., None],
                         feats[jnp.clip(idx, 0, n - 1)], 0.0)           # [K3,N,inc]
    lhs = jnp.transpose(gathered, (1, 0, 2)).reshape(n, k3 * inc)       # [N,KC]
    rhs = weight.reshape(k3 * inc, outc)                                # [KC,outc]

    # ---- pad to TPU-friendly (lane-dense) shapes ---------------------------
    kc = k3 * inc
    kc_p = _round_up(kc, 128)
    co_p = _round_up(outc, 128)
    tn = min(tile_n_cap, _round_up(n, 8))
    n_p = _round_up(n, tn)
    num_tiles = n_p // tn

    lhs_p = jnp.zeros((n_p, kc_p), jnp.bfloat16).at[:n, :kc].set(
        lhs.astype(jnp.bfloat16))
    rhs_p = jnp.zeros((kc_p, co_p), jnp.bfloat16).at[:kc, :outc].set(
        rhs.astype(jnp.bfloat16))

    # ---- pass 1: conv matmul + per-tile BN partial statistics --------------
    y_conv, psum, psq = pl.pallas_call(
        _conv_stats_kernel,
        out_shape=(
            jax.ShapeDtypeStruct((n_p, co_p), jnp.float32),
            jax.ShapeDtypeStruct((num_tiles, 8, co_p), jnp.float32),
            jax.ShapeDtypeStruct((num_tiles, 8, co_p), jnp.float32),
        ),
        grid_spec=pltpu.PrefetchScalarGridSpec(
            num_scalar_prefetch=0,
            grid=(num_tiles,),
            in_specs=[
                pl.BlockSpec((tn, kc_p), lambda i: (i, 0)),
                pl.BlockSpec((kc_p, co_p), lambda i: (0, 0)),   # weight resident
            ],
            out_specs=[
                pl.BlockSpec((tn, co_p), lambda i: (i, 0)),
                pl.BlockSpec((1, 8, co_p), lambda i: (i, 0, 0)),
                pl.BlockSpec((1, 8, co_p), lambda i: (i, 0, 0)),
            ],
        ),
        compiler_params=pltpu.CompilerParams(
            dimension_semantics=("parallel",),
            vmem_limit_bytes=48 * 1024 * 1024,
        ),
    )(lhs_p, rhs_p)

    # ---- finalize BN statistics (tiny [num_tiles, C] reduction in JAX) -----
    # Padded rows/channels contribute exactly zero to the partial sums, so
    # dividing by the real N gives correct full-batch (biased) statistics.
    total = jnp.sum(psum[:, 0, :], axis=0)
    total_sq = jnp.sum(psq[:, 0, :], axis=0)
    mean = total / n
    var = jnp.maximum(total_sq / n - mean * mean, 0.0)   # biased var (training)
    gamma_p = jnp.zeros((co_p,), jnp.float32).at[:outc].set(gamma)
    beta_p = jnp.zeros((co_p,), jnp.float32).at[:outc].set(beta)
    scale = (gamma_p * jax.lax.rsqrt(var + eps)).reshape(1, co_p)
    bias = (beta_p - mean * scale[0]).reshape(1, co_p)
    # TODO(synk): BatchNorm running_mean/running_var buffers are not updated.

    # ---- pass 2: tiled fused affine + ReLU ----------------------------------
    out_p = pl.pallas_call(
        _bn_relu_kernel,
        out_shape=jax.ShapeDtypeStruct((n_p, co_p), feats.dtype),
        grid_spec=pltpu.PrefetchScalarGridSpec(
            num_scalar_prefetch=0,
            grid=(num_tiles,),
            in_specs=[
                pl.BlockSpec((tn, co_p), lambda i: (i, 0)),
                pl.BlockSpec((1, co_p), lambda i: (0, 0)),
                pl.BlockSpec((1, co_p), lambda i: (0, 0)),
            ],
            out_specs=pl.BlockSpec((tn, co_p), lambda i: (i, 0)),
        ),
        compiler_params=pltpu.CompilerParams(
            dimension_semantics=("parallel",),
            vmem_limit_bytes=48 * 1024 * 1024,
        ),
    )(y_conv, scale, bias)

    return out_p[:n, :outc]


# -------------------------------------------------------------------- main ---
if __name__ == "__main__":
    key = jax.random.PRNGKey(0)
    k_pts, k_feat, k_w = jax.random.split(key, 3)

    # small, deterministic sparse problem
    B, S = 2, 16          # 2 batches, 16^3 voxel grid
    N = 64                # active points
    INC, OUTC, KS = 4, 8, 3

    # unique active voxel coordinates
    flat = jax.random.choice(k_pts, B * S * S * S, shape=(N,), replace=False)
    bb = flat // (S * S * S)
    rem = flat % (S * S * S)
    xx = rem // (S * S)
    yy = (rem // S) % S
    zz = rem % S
    coords = jnp.stack([bb, xx, yy, zz], axis=-1).astype(jnp.int32)   # [N,4]
    feats = jax.random.normal(k_feat, (N, INC), dtype=jnp.float32)    # [N,INC]

    # parameters (deterministic init; shapes from spnn.Conv3d / BatchNorm)
    fan_in = KS * KS * KS * INC
    weight = (jax.random.normal(k_w, (KS * KS * KS, INC, OUTC),
                                dtype=jnp.float32) / jnp.sqrt(fan_in))
    gamma = jnp.ones((OUTC,), jnp.float32)    # BatchNorm weight init = 1
    beta = jnp.zeros((OUTC,), jnp.float32)    # BatchNorm bias   init = 0

    out = basic_sparse_deconvolution_block(coords, feats, weight, gamma, beta,
                                           grid_size=(B, S), ks=KS)
    out = jax.block_until_ready(out)
    assert out.shape == (N, OUTC)
    assert bool(jnp.all(jnp.isfinite(out)))
    print("KERNEL_OK")
</pallas_src>

<mosaic_0001>
module attributes {stable_mosaic.version = 11 : i64} {
  func.func @_conv_stats_kernel(%arg0: i32, %arg1: memref<64x128xbf16, #tpu.memory_space<vmem>>, %arg2: memref<128x128xbf16, #tpu.memory_space<vmem>>, %arg3: memref<64x128xf32, #tpu.memory_space<vmem>>, %arg4: memref<1x8x128xf32, #tpu.memory_space<vmem>>, %arg5: memref<1x8x128xf32, #tpu.memory_space<vmem>>) attributes {dimension_semantics = [#tpu.dimension_semantics<parallel>], iteration_bounds = array<i64: 1>, scalar_prefetch = 0 : i64, scratch_operands = 0 : i64, tpu.core_type = #tpu.core_type<tc>, window_params = [{transform_indices = @transform_0, window_bounds = array<i64: 64, 128>}, {pipeline_mode = #tpu.pipeline_mode<synchronous>, transform_indices = @transform_1, window_bounds = array<i64: 128, 128>}, {transform_indices = @transform_2, window_bounds = array<i64: 64, 128>}, {transform_indices = @transform_3, window_bounds = array<i64: 1, 8, 128>}, {transform_indices = @transform_4, window_bounds = array<i64: 1, 8, 128>}]} {
    %c0 = arith.constant 0 : index
    %c0_0 = arith.constant 0 : index
    %0 = vector.load %arg1[%c0, %c0_0] : memref<64x128xbf16, #tpu.memory_space<vmem>>, vector<64x128xbf16>
    %c0_1 = arith.constant 0 : index
    %c0_2 = arith.constant 0 : index
    %1 = vector.load %arg2[%c0_1, %c0_2] : memref<128x128xbf16, #tpu.memory_space<vmem>>, vector<128x128xbf16>
    %cst = arith.constant dense<0.000000e+00> : vector<64x128xf32>
    %2 = tpu.matmul %0, %1, %cst {dimension_numbers = #tpu.dot_dimension_numbers<[1], [0], [0], [1], [0, 0, 1, 1], [], []>} : vector<64x128xbf16>, vector<128x128xbf16>, vector<64x128xf32> -> vector<64x128xf32>
    %c0_3 = arith.constant 0 : index
    %c0_4 = arith.constant 0 : index
    %3 = vector.load %arg3[%c0_3, %c0_4] : memref<64x128xf32, #tpu.memory_space<vmem>>, vector<64x128xf32>
    tpu.vector_store %arg3[%c0_3, %c0_4], %2 {strides = array<i32>} : memref<64x128xf32, #tpu.memory_space<vmem>>, vector<64x128xf32>,
    %cst_5 = arith.constant dense<0.000000e+00> : vector<128xf32>
    %4 = vector.multi_reduction <add>, %2, %cst_5 [0] : vector<64x128xf32> to vector<128xf32>
    %5 = vector.shape_cast %4 : vector<128xf32> to vector<1x128xf32>
    %6 = arith.mulf %2, %2 : vector<64x128xf32>
    %cst_6 = arith.constant dense<0.000000e+00> : vector<128xf32>
    %7 = vector.multi_reduction <add>, %6, %cst_6 [0] : vector<64x128xf32> to vector<128xf32>
    %8 = vector.shape_cast %7 : vector<128xf32> to vector<1x128xf32>
    %9 = vector.shape_cast %5 : vector<1x128xf32> to vector<1x1x128xf32>
    %10 = vector.shape_cast %9 : vector<1x1x128xf32> to vector<1x1x128xf32>
    %11 = vector.broadcast %10 : vector<1x1x128xf32> to vector<1x8x128xf32>
    %c0_7 = arith.constant 0 : index
    %c0_8 = arith.constant 0 : index
    %c0_9 = arith.constant 0 : index
    %12 = vector.load %arg4[%c0_7, %c0_8, %c0_9] : memref<1x8x128xf32, #tpu.memory_space<vmem>>, vector<1x8x128xf32>
    tpu.vector_store %arg4[%c0_7, %c0_8, %c0_9], %11 {strides = array<i32>} : memref<1x8x128xf32, #tpu.memory_space<vmem>>, vector<1x8x128xf32>,
    %13 = vector.shape_cast %8 : vector<1x128xf32> to vector<1x1x128xf32>
    %14 = vector.shape_cast %13 : vector<1x1x128xf32> to vector<1x1x128xf32>
    %15 = vector.broadcast %14 : vector<1x1x128xf32> to vector<1x8x128xf32>
    %c0_10 = arith.constant 0 : index
    %c0_11 = arith.constant 0 : index
    %c0_12 = arith.constant 0 : index
    %16 = vector.load %arg5[%c0_10, %c0_11, %c0_12] : memref<1x8x128xf32, #tpu.memory_space<vmem>>, vector<1x8x128xf32>
    tpu.vector_store %arg5[%c0_10, %c0_11, %c0_12], %15 {strides = array<i32>} : memref<1x8x128xf32, #tpu.memory_space<vmem>>, vector<1x8x128xf32>,
    return
  }
  func.func @transform_0(%arg0: i32) -> (i32, i32) {
    %c0_i32 = arith.constant 0 : i32
    %c0_i32_0 = arith.constant 0 : i32
    return %arg0, %c0_i32 : i32, i32
  }
  func.func @transform_1(%arg0: i32) -> (i32, i32) {
    %c0_i32 = arith.constant 0 : i32
    %c0_i32_0 = arith.constant 0 : i32
    %c0_i32_1 = arith.constant 0 : i32
    return %c0_i32, %c0_i32_0 : i32, i32
  }
  func.func @transform_2(%arg0: i32) -> (i32, i32) {
    %c0_i32 = arith.constant 0 : i32
    %c0_i32_0 = arith.constant 0 : i32
    return %arg0, %c0_i32 : i32, i32
  }
  func.func @transform_3(%arg0: i32) -> (i32, i32, i32) {
    %c0_i32 = arith.constant 0 : i32
    %c0_i32_0 = arith.constant 0 : i32
    %c0_i32_1 = arith.constant 0 : i32
    return %arg0, %c0_i32, %c0_i32_0 : i32, i32, i32
  }
  func.func @transform_4(%arg0: i32) -> (i32, i32, i32) {
    %c0_i32 = arith.constant 0 : i32
    %c0_i32_0 = arith.constant 0 : i32
    %c0_i32_1 = arith.constant 0 : i32
    return %arg0, %c0_i32, %c0_i32_0 : i32, i32, i32
  }
}

</mosaic_0001>

<llo_original>
// kernel: tpu_custom_call.1
$region0: #{tpu_custom_call.1}
  #allocation0 [shape = 'u32[]', space=smem, size = 0x4, offset = 0x4, fixed_abs, tag = 'smem constant byte address 0x4 - core index']
  #allocation1 [shape = 'u32[144,128]{1,0:T(1,128)}', space=vmem, size = 0x12000, scoped, tag = 'internal scratch']
  %s0 = inlined_call_operand.hbm [shape: bf16[64,128], index: 0, kind: input, shape index: {}]
  %s1 = inlined_call_operand.hbm [shape: bf16[128,128], index: 1, kind: input, shape index: {}]
  %s2 = inlined_call_operand.hbm [shape: f32[64,128], index: 2, kind: output, shape index: {0}]
  %s3 = inlined_call_operand.hbm [shape: f32[1,8,128], index: 3, kind: output, shape index: {1}]
  %s4 = inlined_call_operand.hbm [shape: f32[1,8,128], index: 4, kind: output, shape index: {2}]
  %5 = xla_tuple %s2, %s3, %s4
  %s6 = sld [smem:[#allocation0]]
  $region42: #{tpu_custom_call.1} parent=0
    _
  %s8 = ssub.s32 1, %s6
  %s9 = scalar_select 0, %s8, %s6
  $region1: #{tpu_custom_call.1} parent=0
    #allocation2 [shape = 'u8[16384]{0}', space=vmem, size = 0x4000, scoped, tag = 'input window, operand 0, single buffered']
    #allocation3 [shape = 's32[1]{0}', space=sflag, size = 0x4, scoped, tag = 'scoped memory for tpu_custom_call.1']
    #allocation4 [shape = 's32[1]{0}', space=sflag, size = 0x4, scoped, tag = 'scoped memory for tpu_custom_call.1']
    #allocation5 [shape = 'u8[32768]{0}', space=vmem, size = 0x8000, scoped, tag = 'input window, operand 1, single buffered']
    #allocation6 [shape = 's32[1]{0}', space=sflag, size = 0x4, scoped, tag = 'scoped memory for tpu_custom_call.1']
    #allocation7 [shape = 'u8[32768]{0}', space=vmem, size = 0x8000, scoped, tag = 'output window, operand 0, single buffered']
    #allocation8 [shape = 'u8[4096]{0}', space=vmem, size = 0x1000, scoped, tag = 'output window, operand 1, single buffered']
    #allocation9 [shape = 's32[1]{0}', space=sflag, size = 0x4, scoped, tag = 'scoped memory for tpu_custom_call.1']
    #allocation10 [shape = 'u8[4096]{0}', space=vmem, size = 0x1000, scoped, tag = 'output window, operand 2, single buffered']
    %10 = vsyncpa [#allocation3], 0
    %11 = vsyncpa [#allocation6], 0
    %12 = vsyncpa [#allocation4], 0
    %13 = vsyncpa [#allocation9], 0
    // Predicated region
    $region2: #{tpu_custom_call.1} parent=1 // pred_check
      _
    $region3: #{tpu_custom_call.1} parent=1 // pred_check_branch
      %15 = sbr.rel (0) target = $region5
    $region4: #{tpu_custom_call.1} parent=1 // pred_region
      %s17 = ssub.s32 512, 512
      %18 = vsyncadd [#allocation3], %s17
      %s19 = sshll.u32 [#allocation2], 4
      %s20 = int_to_ptr.vmem [resolvable:$true] %s19
      %25 = dma.hbm_to_vmem [thread:$0]  %s0, 512, %s20, [#allocation3], 64, 64, 4
    $region5: #{tpu_custom_call.1} parent=1 // pred_fallthru
      _
    // Predicated region
    $region6: #{tpu_custom_call.1} parent=1 // pred_check
      _
    $region7: #{tpu_custom_call.1} parent=1 // pred_check_branch
      %27 = sbr.rel (0) target = $region9
    $region8: #{tpu_custom_call.1} parent=1 // pred_region
      %s29 = ssub.s32 1024, 1024
      %30 = vsyncadd [#allocation6], %s29
      %s31 = sshll.u32 [#allocation5], 4
      %s32 = int_to_ptr.vmem [resolvable:$true] %s31
      %37 = dma.hbm_to_vmem [thread:$0]  %s1, 1024, %s32, [#allocation6], 64, 64, 4
    $region9: #{tpu_custom_call.1} parent=1 // pred_fallthru
      _
    // Predicated region
    $region10: #{tpu_custom_call.1} parent=1 // pred_check
      _
    $region11: #{tpu_custom_call.1} parent=1 // pred_check_branch
      %39 = sbr.rel (0) target = $region13
    $region12: #{tpu_custom_call.1} parent=1 // pred_region
      %40 = dma.done [#allocation3], 512
    $region13: #{tpu_custom_call.1} parent=1 // pred_fallthru
      _
    // Predicated region
    $region14: #{tpu_custom_call.1} parent=1 // pred_check
      _
    $region15: #{tpu_custom_call.1} parent=1 // pred_check_branch
      %42 = sbr.rel (0) target = $region17
    $region16: #{tpu_custom_call.1} parent=1 // pred_region
      %43 = dma.done [#allocation6], 1024
    $region17: #{tpu_custom_call.1} parent=1 // pred_fallthru
      _
    %v45 = vld [vmem:[#allocation2] sm:$0xf]
    %v46 = vld [vmem:[#allocation2 + $0x4] sm:$0xf]
    %v47 = vld [vmem:[#allocation2 + $0x8] sm:$0xf]
    %v48 = vld [vmem:[#allocation2 + $0xc] sm:$0xf]
    %v49 = vld [vmem:[#allocation2 + $0x10] sm:$0xf]
    %v50 = vld [vmem:[#allocation2 + $0x14] sm:$0xf]
    %v51 = vld [vmem:[#allocation2 + $0x18] sm:$0xf]
    %v52 = vld [vmem:[#allocation2 + $0x1c] sm:$0xf]
    %v53 = vld [vmem:[#allocation5] sm:$0xf]
    %v54 = vld [vmem:[#allocation5 + $0x4] sm:$0xf]
    %v55 = vld [vmem:[#allocation5 + $0x8] sm:$0xf]
    %v56 = vld [vmem:[#allocation5 + $0xc] sm:$0xf]
    %v57 = vld [vmem:[#allocation5 + $0x10] sm:$0xf]
    %v58 = vld [vmem:[#allocation5 + $0x14] sm:$0xf]
    %v59 = vld [vmem:[#allocation5 + $0x18] sm:$0xf]
    %v60 = vld [vmem:[#allocation5 + $0x1c] sm:$0xf]
    %v61 = vld [vmem:[#allocation5 + $0x20] sm:$0xf]
    %v62 = vld [vmem:[#allocation5 + $0x24] sm:$0xf]
    %v63 = vld [vmem:[#allocation5 + $0x28] sm:$0xf]
    %v64 = vld [vmem:[#allocation5 + $0x2c] sm:$0xf]
    %v65 = vld [vmem:[#allocation5 + $0x30] sm:$0xf]
    %v66 = vld [vmem:[#allocation5 + $0x34] sm:$0xf]
    %v67 = vld [vmem:[#allocation5 + $0x38] sm:$0xf]
    %v68 = vld [vmem:[#allocation5 + $0x3c] sm:$0xf]
    %v77 = vunpack.c.l.b16 %v45
    %v78 = vunpack.c.l.b16 %v46
    %v79 = vunpack.c.l.b16 %v47
    %v80 = vunpack.c.l.b16 %v48
    %v81 = vunpack.c.l.b16 %v49
    %v82 = vunpack.c.l.b16 %v50
    %v83 = vunpack.c.l.b16 %v51
    %v84 = vunpack.c.l.b16 %v52
    %v85 = vpack.c.b16 %v78, %v77
    %v86 = vpack.c.b16 %v80, %v79
    %v87 = vpack.c.b16 %v82, %v81
    %v88 = vpack.c.b16 %v84, %v83
    %v109 = vunpack.c.l.b16 %v53
    %v110 = vunpack.c.l.b16 %v54
    %v111 = vunpack.c.l.b16 %v55
    %v112 = vunpack.c.l.b16 %v56
    %v113 = vunpack.c.l.b16 %v57
    %v114 = vunpack.c.l.b16 %v58
    %v115 = vunpack.c.l.b16 %v59
    %v116 = vunpack.c.l.b16 %v60
    %v117 = vunpack.c.l.b16 %v61
    %v118 = vunpack.c.l.b16 %v62
    %v119 = vunpack.c.l.b16 %v63
    %v120 = vunpack.c.l.b16 %v64
    %v121 = vunpack.c.l.b16 %v65
    %v122 = vunpack.c.l.b16 %v66
    %v123 = vunpack.c.l.b16 %v67
    %v124 = vunpack.c.l.b16 %v68
    %v125 = vpack.c.b16 %v110, %v109
    %v126 = vpack.c.b16 %v112, %v111
    %v127 = vpack.c.b16 %v114, %v113
    %v128 = vpack.c.b16 %v116, %v115
    %v129 = vpack.c.b16 %v118, %v117
    %v130 = vpack.c.b16 %v120, %v119
    %v131 = vpack.c.b16 %v122, %v121
    %v132 = vpack.c.b16 %v124, %v123
    %141 = vmatprep.subr.bf16.mxu0 0
    %142 = vmatpush1.bf16.msra.mxu0 %v125
    %143 = vmatprep.subr.bf16.mxu0 0
    %144 = vmatpush1.bf16.msra.mxu0 %v126
    %145 = vmatprep.subr.bf16.mxu0 0
    %146 = vmatpush1.bf16.msra.mxu0 %v127
    %147 = vmatprep.subr.bf16.mxu0 0
    %148 = vmatpush1.bf16.msra.mxu0 %v128
    %149 = vmatprep.subr.bf16.mxu0 0
    %150 = vmatpush1.bf16.msra.mxu0 %v129
    %151 = vmatprep.subr.bf16.mxu0 0
    %152 = vmatpush1.bf16.msra.mxu0 %v130
    %153 = vmatprep.subr.bf16.mxu0 0
    %154 = vmatpush1.bf16.msra.mxu0 %v131
    %155 = vmatprep.subr.bf16.mxu0 0
    %156 = vmatpush1.bf16.msra.mxu0 %v132
    %157 = vmatprep.subr.bf16.mxu0 0
    %158 = vmatpush1.bf16.msra.mxu0 0
    %159 = vmatprep.subr.bf16.mxu0 0
    %160 = vmatpush1.bf16.msra.mxu0 0
    %161 = vmatprep.subr.bf16.mxu0 0
    %162 = vmatpush1.bf16.msra.mxu0 0
    %163 = vmatprep.subr.bf16.mxu0 0
    %164 = vmatpush1.bf16.msra.mxu0 0
    %165 = vmatprep.subr.bf16.mxu0 0
    %166 = vmatpush1.bf16.msra.mxu0 0
    %167 = vmatprep.subr.bf16.mxu0 0
    %168 = vmatpush1.bf16.msra.mxu0 0
    %169 = vmatprep.subr.bf16.mxu0 0
    %170 = vmatpush1.bf16.msra.mxu0 0
    %171 = vmatprep.subr.bf16.mxu0 0
    %172 = vmatpush1.bf16.msra.mxu0 0
    %173 = vmatprep.mubr.bf16.mxu0 0
    %174 = vmatmul.mubr.bf16.gmra.mrb[0].mxu0 %v85
    %v175 = vpop.f32.mrb[0].mxu0
    %v176 = vadd.f32 0.0, %v175
    %v177 = vpop.f32.mrb[0].mxu0
    %v178 = vpop.f32.mrb[0].mxu0
    %v179 = vadd.f32 0.0, %v178
    %v180 = vpop.f32.mrb[0].mxu0
    %181 = vmatprep.mubr.bf16.mxu0 0
    %182 = vmatmul.mubr.bf16.gmra.mrb[0].mxu0 %v86
    %v183 = vpop.f32.mrb[0].mxu0
    %v184 = vadd.f32 0.0, %v183
    %v185 = vpop.f32.mrb[0].mxu0
    %v186 = vpop.f32.mrb[0].mxu0
    %v187 = vadd.f32 0.0, %v186
    %v188 = vpop.f32.mrb[0].mxu0
    %189 = vmatprep.mubr.bf16.mxu0 0
    %190 = vmatmul.mubr.bf16.gmra.mrb[0].mxu0 %v87
    %v191 = vpop.f32.mrb[0].mxu0
    %v192 = vadd.f32 0.0, %v191
    %v193 = vpop.f32.mrb[0].mxu0
    %v194 = vpop.f32.mrb[0].mxu0
    %v195 = vadd.f32 0.0, %v194
    %v196 = vpop.f32.mrb[0].mxu0
    %197 = vmatprep.mubr.bf16.mxu0 0
    %198 = vmatmul.mubr.bf16.gmra.mrb[0].mxu0 %v88
    %v199 = vpop.f32.mrb[0].mxu0
    %v200 = vadd.f32 0.0, %v199
    %v201 = vpop.f32.mrb[0].mxu0
    %v202 = vpop.f32.mrb[0].mxu0
    %v203 = vadd.f32 0.0, %v202
    %v204 = vpop.f32.mrb[0].mxu0
    %205 = vdwg.mxu0
    %206 = vst [vmem:[#allocation7] sm:$0xff] %v176
    %207 = vst [vmem:[#allocation7 + $0x8] sm:$0xff] %v179
    %208 = vst [vmem:[#allocation7 + $0x10] sm:$0xff] %v184
    %209 = vst [vmem:[#allocation7 + $0x18] sm:$0xff] %v187
    %210 = vst [vmem:[#allocation7 + $0x20] sm:$0xff] %v192
    %211 = vst [vmem:[#allocation7 + $0x28] sm:$0xff] %v195
    %212 = vst [vmem:[#allocation7 + $0x30] sm:$0xff] %v200
    %213 = vst [vmem:[#allocation7 + $0x38] sm:$0xff] %v203
    %v214 = vadd.f32 %v176, %v179
    %v215 = vadd.f32 %v214, %v184
    %v216 = vadd.f32 %v215, %v187
    %v217 = vadd.f32 %v216, %v192
    %v218 = vadd.f32 %v217, %v195
    %v219 = vadd.f32 %v218, %v200
    %v220 = vadd.f32 %v219, %v203
    %v221 = vrot.slane %v220, 4
    %v222 = vadd.f32 %v220, %v221
    %v223 = vrot.slane %v222, 2
    %v224 = vadd.f32 %v222, %v223
    %v225 = vrot.slane %v224, 1
    %v226 = vadd.f32 %v224, %v225
    %v227 = vmul.f32 %v176, %v176
    %v228 = vmul.f32 %v179, %v179
    %v229 = vmul.f32 %v184, %v184
    %v230 = vmul.f32 %v187, %v187
    %v231 = vmul.f32 %v192, %v192
    %v232 = vmul.f32 %v195, %v195
    %v233 = vmul.f32 %v200, %v200
    %v234 = vmul.f32 %v203, %v203
    %v235 = vadd.f32 %v227, %v228
    %v236 = vadd.f32 %v235, %v229
    %v237 = vadd.f32 %v236, %v230
    %v238 = vadd.f32 %v237, %v231
    %v239 = vadd.f32 %v238, %v232
    %v240 = vadd.f32 %v239, %v233
    %v241 = vadd.f32 %v240, %v234
    %v242 = vrot.slane %v241, 4
    %v243 = vadd.f32 %v241, %v242
    %v244 = vrot.slane %v243, 2
    %v245 = vadd.f32 %v243, %v244
    %v246 = vrot.slane %v245, 1
    %v247 = vadd.f32 %v245, %v246
    %248 = vst [vmem:[#allocation8] sm:$0xff] %v226
    %249 = vst [vmem:[#allocation10] sm:$0xff] %v247
    // Predicated region
    $region18: #{tpu_custom_call.1} parent=1 // pred_check
      _
    $region19: #{tpu_custom_call.1} parent=1 // pred_check_branch
      %251 = sbr.rel (0) target = $region21
    $region20: #{tpu_custom_call.1} parent=1 // pred_region
      %s253 = ssub.s32 1024, 1024
      %254 = vsyncadd [#allocation4], %s253
      %s255 = sshll.u32 [#allocation7], 4
      %s256 = int_to_ptr.vmem [resolvable:$true] %s255
      %261 = dma.vmem_to_hbm [thread:$0]  %s256, 1024, %s2, [#allocation4], 128, 128, 8
    $region21: #{tpu_custom_call.1} parent=1 // pred_fallthru
      _
    // Predicated region
    $region22: #{tpu_custom_call.1} parent=1 // pred_check
      _
    $region23: #{tpu_custom_call.1} parent=1 // pred_check_branch
      %263 = sbr.rel (0) target = $region25
    $region24: #{tpu_custom_call.1} parent=1 // pred_region
      %s265 = ssub.s32 128, 128
      %266 = vsyncadd [#allocation9], %s265
      %s268 = sshll.u32 [#allocation8], 4
      %s269 = int_to_ptr.vmem [resolvable:$true] %s268
      %271 = dma.vmem_to_hbm [thread:$0]  %s269, 128, %s3, [#allocation9]
    $region25: #{tpu_custom_call.1} parent=1 // pred_fallthru
      _
    // Predicated region
    $region26: #{tpu_custom_call.1} parent=1 // pred_check
      _
    $region27: #{tpu_custom_call.1} parent=1 // pred_check_branch
      %273 = sbr.rel (0) target = $region29
    $region28: #{tpu_custom_call.1} parent=1 // pred_region
      %s275 = ssub.s32 128, 128
      %276 = vsyncadd [#allocation9], %s275
      %s278 = sshll.u32 [#allocation10], 4
      %s279 = int_to_ptr.vmem [resolvable:$true] %s278
      %281 = dma.vmem_to_hbm [thread:$0]  %s279, 128, %s4, [#allocation9]
    $region29: #{tpu_custom_call.1} parent=1 // pred_fallthru
      _
    // Predicated region
    $region30: #{tpu_custom_call.1} parent=1 // pred_check
      _
    $region31: #{tpu_custom_call.1} parent=1 // pred_check_branch
      %283 = sbr.rel (0) target = $region33
    $region32: #{tpu_custom_call.1} parent=1 // pred_region
      %284 = dma.done [#allocation4], 1024
    $region33: #{tpu_custom_call.1} parent=1 // pred_fallthru
      _
    // Predicated region
    $region34: #{tpu_custom_call.1} parent=1 // pred_check
      _
    $region35: #{tpu_custom_call.1} parent=1 // pred_check_branch
      %286 = sbr.rel (0) target = $region37
    $region36: #{tpu_custom_call.1} parent=1 // pred_region
      %287 = dma.done [#allocation9], 128
    $region37: #{tpu_custom_call.1} parent=1 // pred_fallthru
      _
    // Predicated region
    $region38: #{tpu_custom_call.1} parent=1 // pred_check
      _
    $region39: #{tpu_custom_call.1} parent=1 // pred_check_branch
      %289 = sbr.rel (0) target = $region41
    $region40: #{tpu_custom_call.1} parent=1 // pred_region
      %290 = dma.done [#allocation9], 128
    $region41: #{tpu_custom_call.1} parent=1 // pred_fallthru
      _
    %291 = vsyncpa [#allocation3], 1
    %292 = vsyncpa [#allocation6], 1
    %293 = vsyncpa [#allocation4], 1
    %294 = vsyncpa [#allocation9], 1

</llo_original>
